<compile_context>
chip_gen: v6e
topology: v6e:2x2x1
jax: 0.10.0
libtpu: 0.0.40
codegen_flags: <defaults>
</compile_context>

<pallas_src>
import numpy as np
import jax
import jax.numpy as jnp
from jax.experimental import pallas as pl
from jax.experimental.pallas import tpu as pltpu

BINS = (1, 2, 3, 6)
BRANCH_SIZES = tuple(b * b for b in BINS)                      # (1, 4, 9, 36)
BRANCH_OFF = tuple(int(o) for o in
                   np.concatenate([[0], np.cumsum(BRANCH_SIZES)[:-1]]))  # (0,1,5,14)
BBT = 128                                                      # packed branch width (lane tile)
NEG_MASK = -1e30                                               # "kill via relu" value
assert sum(BRANCH_SIZES) <= BBT


# ----------------------------------------------------------------------------
# Matrix construction helpers (pure numpy glue, computed once on the host).
# ----------------------------------------------------------------------------
def pooling_matrix(H, W, bn):
    # AvgPool2d(kernel_size = H-(bn-1)*s, stride = s = H // bn); windows may
    # overlap — exactly the construction in the PyTorch module.
    sh, sw = H // bn, W // bn
    kh, kw = H - (bn - 1) * sh, W - (bn - 1) * sw
    P = np.zeros((bn * bn, H * W), dtype=np.float32)
    inv = 1.0 / float(kh * kw)
    for i in range(bn):
        for j in range(bn):
            row = i * bn + j
            for h in range(i * sh, i * sh + kh):
                for w in range(j * sw, j * sw + kw):
                    P[row, h * W + w] = inv
    return P


def upsample_matrix_1d(out_size, in_size):
    # bilinear, align_corners=True
    M = np.zeros((out_size, in_size), dtype=np.float32)
    if in_size == 1:
        M[:, 0] = 1.0
        return M
    for o in range(out_size):
        src = o * (in_size - 1) / (out_size - 1)
        lo = int(np.floor(src))
        hi = min(lo + 1, in_size - 1)
        frac = src - lo
        M[o, lo] += 1.0 - frac
        M[o, hi] += frac
    return M


def upsample_matrix_2d(H, W, bn):
    Mh = upsample_matrix_1d(H, bn)
    Mw = upsample_matrix_1d(W, bn)
    U = np.einsum("hb,wg->hwbg", Mh, Mw).reshape(H * W, bn * bn).astype(np.float32)
    return U, Mh, Mw


# ----------------------------------------------------------------------------
# Wrapper: builds packed branch matrices, runs the two Pallas phases.
# ----------------------------------------------------------------------------
def ppm1_forward(x_nchw, conv_w, bn_scale, bn_bias, hw_tile=128):
    """x_nchw: (N, C, H, W); conv_w: (4, C, R); bn_scale/bn_bias: (4, R)."""
    N, C, H, W = x_nchw.shape
    R = conv_w.shape[-1]
    HW = H * W
    FR = 4 * R
    assert hw_tile % 128 == 0 and HW % hw_tile == 0
    KH = HW // hw_tile

    # Packed, zero-padded stacked branch matrices:
    #   Pt_all: (HW, 128) — cols [off_b : off_b+bin^2] hold P_b^T, rest zero.
    #   Ut_all: (128, HW) — rows [off_b : off_b+bin^2] hold U_b^T, rest zero.
    #   mask:   (FR, 128) — 1 on each branch's diagonal block, else 0.
    Pt_all = np.zeros((HW, BBT), dtype=np.float32)
    Ut_all = np.zeros((BBT, HW), dtype=np.float32)
    mask_np = np.zeros((FR, BBT), dtype=np.float32)
    Mh_list, Mw_list = [], []
    for bi, bn in enumerate(BINS):
        P = pooling_matrix(H, W, bn)               # (bin^2, HW)
        U, Mh, Mw = upsample_matrix_2d(H, W, bn)   # (HW, bin^2)
        off = BRANCH_OFF[bi]
        Pt_all[:, off:off + bn * bn] = P.T
        Ut_all[off:off + bn * bn, :] = U.T
        mask_np[bi * R:(bi + 1) * R, off:off + bn * bn] = 1.0
        Mh_list.append(Mh)
        Mw_list.append(Mw)

    # Channels-first: (N, C, H, W) -> (N, C, HW) is a pure reshape.
    x3 = x_nchw.reshape(N, C, HW).astype(jnp.float32)
    Pt = jnp.asarray(Pt_all, dtype=jnp.bfloat16)                # bf16 MXU operand
    Ut = jnp.asarray(Ut_all, dtype=jnp.bfloat16)                # bf16 MXU operand

    # Fold BN (eval) scale into the 1x1 conv weight; bf16 MXU operand.
    w_folded = conv_w.astype(jnp.float32) * bn_scale.astype(jnp.float32)[:, None, :]
    Wt = jnp.transpose(w_folded, (0, 2, 1)).reshape(FR, C).astype(jnp.bfloat16)

    # BN bias + branch block-diagonal mask fused into one f32 array:
    # relu(z + bm) == relu(z + bias) on diagonal blocks, exactly 0 elsewhere.
    mask = jnp.asarray(mask_np)
    bias_rows = bn_bias.astype(jnp.float32).reshape(FR, 1)
    bm = mask * bias_rows + (1.0 - mask) * NEG_MASK              # (FR, BBT) f32

    # ---------------- Phase A: pooled accumulation + 1x1 conv + bias/mask/ReLU
    def pool_conv_kernel(x_ref, pt_ref, wt_ref, bm_ref, y_ref, acc_ref):
        k = pl.program_id(1)

        @pl.when(k == 0)
        def _():
            acc_ref[...] = jnp.zeros_like(acc_ref)

        acc_ref[...] += jnp.dot(x_ref[0].astype(jnp.bfloat16), pt_ref[...],
                                preferred_element_type=jnp.float32)   # (C, BBT)

        @pl.when(k == pl.num_programs(1) - 1)
        def _():
            z = jnp.dot(wt_ref[...], acc_ref[...].astype(jnp.bfloat16),
                        preferred_element_type=jnp.float32)           # (FR, BBT)
            y_ref[0] = jnp.maximum(z + bm_ref[...], 0.0).astype(y_ref.dtype)

    y = pl.pallas_call(
        pool_conv_kernel,
        out_shape=jax.ShapeDtypeStruct((N, FR, BBT), jnp.float32),
        grid_spec=pltpu.PrefetchScalarGridSpec(
            num_scalar_prefetch=0,
            grid=(N, KH),
            in_specs=[
                pl.BlockSpec((1, C, hw_tile), lambda n, k: (n, 0, k)),  # x tile
                pl.BlockSpec((hw_tile, BBT), lambda n, k: (k, 0)),      # Pt tile
                pl.BlockSpec((FR, C), lambda n, k: (0, 0)),             # folded W^T
                pl.BlockSpec((FR, BBT), lambda n, k: (0, 0)),           # bias+mask
            ],
            out_specs=pl.BlockSpec((1, FR, BBT), lambda n, k: (n, 0, 0)),
            scratch_shapes=[pltpu.VMEM((C, BBT), jnp.float32)],         # pooled acc
        ),
        compiler_params=pltpu.CompilerParams(
            dimension_semantics=("parallel", "arbitrary")),
    )(x3, Pt, Wt, bm)

    # ---------------- Phase B: bilinear upsample + fused identity passthrough
    def upsample_kernel(x_ref, y_ref, ut_ref, o_ref):
        up = jnp.dot(y_ref[0].astype(jnp.bfloat16), ut_ref[...],
                     preferred_element_type=jnp.float32)               # (FR, hw_tile)
        # rows [0, C): original x (exact f32), rows [C, C+FR): branch outputs;
        # one lane-dense full-block store, no wrapper-side concatenate.
        o_ref[0] = jnp.concatenate([x_ref[0], up], axis=0).astype(o_ref.dtype)

    out3 = pl.pallas_call(
        upsample_kernel,
        out_shape=jax.ShapeDtypeStruct((N, C + FR, HW), jnp.float32),
        grid_spec=pltpu.PrefetchScalarGridSpec(
            num_scalar_prefetch=0,
            grid=(N, KH),
            in_specs=[
                pl.BlockSpec((1, C, hw_tile), lambda n, k: (n, 0, k)),  # x tile
                pl.BlockSpec((1, FR, BBT), lambda n, k: (n, 0, 0)),     # y (resident per n)
                pl.BlockSpec((BBT, hw_tile), lambda n, k: (0, k)),      # Ut tile
            ],
            out_specs=pl.BlockSpec((1, C + FR, hw_tile), lambda n, k: (n, 0, k)),
        ),
        compiler_params=pltpu.CompilerParams(
            dimension_semantics=("parallel", "parallel")),
    )(x3, y, Ut)

    # (N, C+4R, HW) is already NCHW channel order — reshape only.
    return out3.reshape(N, C + FR, H, W), (Mh_list, Mw_list)


# ----------------------------------------------------------------------------
# Pure-JAX reference (window pooling done independently of the P matrices).
# ----------------------------------------------------------------------------
def ppm1_reference(x_nchw, conv_w, bn_scale, bn_bias, Mh_list, Mw_list):
    N, C, H, W = x_nchw.shape
    outs = [x_nchw.astype(jnp.float32)]
    for bi, bn in enumerate(BINS):
        sh, sw = H // bn, W // bn
        kh, kw = H - (bn - 1) * sh, W - (bn - 1) * sw
        rows = []
        for i in range(bn):
            cols = []
            for j in range(bn):
                win = x_nchw[:, :, i * sh:i * sh + kh, j * sw:j * sw + kw]
                cols.append(jnp.mean(win, axis=(2, 3)))
            rows.append(jnp.stack(cols, axis=-1))
        pooled = jnp.stack(rows, axis=-2)                         # (N, C, bn, bn)
        y = jnp.einsum("ncbg,cr->nrbg", pooled, conv_w[bi])
        y = y * bn_scale[bi][None, :, None, None] + bn_bias[bi][None, :, None, None]
        y = jnp.maximum(y, 0.0)
        up = jnp.einsum("hb,nrbg,wg->nrhw",
                        jnp.asarray(Mh_list[bi]), y, jnp.asarray(Mw_list[bi]))
        outs.append(up)
    return jnp.concatenate(outs, axis=1)


if __name__ == "__main__":
    N, C, H, W = 2, 4, 16, 16     # in_dim = 4
    R = 4                         # reduction_dim = 4

    key = jax.random.PRNGKey(0)
    kx, kw, kg, kb = jax.random.split(key, 4)

    x = jax.random.normal(kx, (N, C, H, W), dtype=jnp.float32)

    # Deterministic synthetic parameters.
    conv_w = 0.1 * jax.random.normal(kw, (4, C, R), dtype=jnp.float32)
    gamma = 1.0 + 0.05 * jax.random.normal(kg, (4, R), dtype=jnp.float32)
    beta = 0.05 * jax.random.normal(kb, (4, R), dtype=jnp.float32)
    running_mean = jnp.zeros((4, R), dtype=jnp.float32)
    running_var = jnp.ones((4, R), dtype=jnp.float32)
    eps = 1e-5
    bn_scale = gamma / jnp.sqrt(running_var + eps)
    bn_bias = beta - running_mean * bn_scale

    out, (Mh_list, Mw_list) = ppm1_forward(x, conv_w, bn_scale, bn_bias, hw_tile=128)
    out = jax.block_until_ready(out)

    ref = ppm1_reference(x, conv_w, bn_scale, bn_bias, Mh_list, Mw_list)
    ref = jax.block_until_ready(ref)

    assert out.shape == (N, C + 4 * R, H, W), out.shape
    # Tolerance loosened vs f32-only version because matmul operands are bf16
    # (accumulation stays f32); the x-passthrough rows are bit-exact.
    np.testing.assert_allclose(np.asarray(out), np.asarray(ref), rtol=2e-2, atol=2e-2)
    print("KERNEL_OK")
</pallas_src>

<mosaic_0001>
module attributes {stable_mosaic.version = 11 : i64} {
  func.func @pool_conv_kernel(%arg0: i32, %arg1: i32, %arg2: memref<1x4x128xf32, #tpu.memory_space<vmem>>, %arg3: memref<128x128xbf16, #tpu.memory_space<vmem>>, %arg4: memref<16x4xbf16, #tpu.memory_space<vmem>>, %arg5: memref<16x128xf32, #tpu.memory_space<vmem>>, %arg6: memref<1x16x128xf32, #tpu.memory_space<vmem>>, %arg7: memref<4x128xf32, #tpu.memory_space<vmem>>) attributes {dimension_semantics = [#tpu.dimension_semantics<parallel>, #tpu.dimension_semantics<arbitrary>], iteration_bounds = array<i64: 2, 2>, scalar_prefetch = 0 : i64, scratch_operands = 1 : i64, tpu.core_type = #tpu.core_type<tc>, window_params = [{transform_indices = @transform_0, window_bounds = array<i64: 1, 4, 128>}, {transform_indices = @transform_1, window_bounds = array<i64: 128, 128>}, {pipeline_mode = #tpu.pipeline_mode<synchronous>, transform_indices = @transform_2, window_bounds = array<i64: 16, 4>}, {pipeline_mode = #tpu.pipeline_mode<synchronous>, transform_indices = @transform_3, window_bounds = array<i64: 16, 128>}, {transform_indices = @transform_4, window_bounds = array<i64: 1, 16, 128>}]} {
    %c0_i32 = arith.constant 0 : i32
    %0 = arith.cmpi eq, %arg1, %c0_i32 : i32
    %1 = arith.extui %0 : i1 to i32
    %c0_i32_0 = arith.constant 0 : i32
    %2 = arith.cmpi ne, %1, %c0_i32_0 : i32
    scf.if %2 {
      %cst_10 = arith.constant 0.000000e+00 : f32
      %14 = vector.broadcast %cst_10 : f32 to vector<4x128xf32>
      %c0_11 = arith.constant 0 : index
      %c0_12 = arith.constant 0 : index
      %15 = vector.load %arg7[%c0_11, %c0_12] : memref<4x128xf32, #tpu.memory_space<vmem>>, vector<4x128xf32>
      tpu.vector_store %arg7[%c0_11, %c0_12], %14 {strides = array<i32>} : memref<4x128xf32, #tpu.memory_space<vmem>>, vector<4x128xf32>,
    } else {
    }
    %c0 = arith.constant 0 : index
    %c0_1 = arith.constant 0 : index
    %3 = vector.load %arg7[%c0, %c0_1] : memref<4x128xf32, #tpu.memory_space<vmem>>, vector<4x128xf32>
    %c0_2 = arith.constant 0 : index
    %c0_3 = arith.constant 0 : index
    %c0_4 = arith.constant 0 : index
    %4 = vector.load %arg2[%c0_2, %c0_3, %c0_4] : memref<1x4x128xf32, #tpu.memory_space<vmem>>, vector<1x4x128xf32>
    %5 = vector.shape_cast %4 : vector<1x4x128xf32> to vector<4x128xf32>
    %6 = arith.truncf %5 : vector<4x128xf32> to vector<4x128xbf16>
    %c0_5 = arith.constant 0 : index
    %c0_6 = arith.constant 0 : index
    %7 = vector.load %arg3[%c0_5, %c0_6] : memref<128x128xbf16, #tpu.memory_space<vmem>>, vector<128x128xbf16>
    %cst = arith.constant dense<0.000000e+00> : vector<4x128xf32>
    %8 = tpu.matmul %6, %7, %cst {dimension_numbers = #tpu.dot_dimension_numbers<[1], [0], [0], [1], [0, 0, 1, 1], [], []>} : vector<4x128xbf16>, vector<128x128xbf16>, vector<4x128xf32> -> vector<4x128xf32>
    %9 = arith.addf %3, %8 : vector<4x128xf32>
    %c0_7 = arith.constant 0 : index
    %c0_8 = arith.constant 0 : index
    %10 = vector.load %arg7[%c0_7, %c0_8] : memref<4x128xf32, #tpu.memory_space<vmem>>, vector<4x128xf32>
    tpu.vector_store %arg7[%c0_7, %c0_8], %9 {strides = array<i32>} : memref<4x128xf32, #tpu.memory_space<vmem>>, vector<4x128xf32>,
    %c1_i32 = arith.constant 1 : i32
    %11 = arith.cmpi eq, %arg1, %c1_i32 : i32
    %12 = arith.extui %11 : i1 to i32
    %c0_i32_9 = arith.constant 0 : i32
    %13 = arith.cmpi ne, %12, %c0_i32_9 : i32
    scf.if %13 {
      %c0_10 = arith.constant 0 : index
      %c0_11 = arith.constant 0 : index
      %14 = vector.load %arg4[%c0_10, %c0_11] : memref<16x4xbf16, #tpu.memory_space<vmem>>, vector<16x4xbf16>
      %c0_12 = arith.constant 0 : index
      %c0_13 = arith.constant 0 : index
      %15 = vector.load %arg7[%c0_12, %c0_13] : memref<4x128xf32, #tpu.memory_space<vmem>>, vector<4x128xf32>
      %16 = arith.truncf %15 : vector<4x128xf32> to vector<4x128xbf16>
      %cst_14 = arith.constant dense<0.000000e+00> : vector<16x128xf32>
      %17 = tpu.matmul %14, %16, %cst_14 {dimension_numbers = #tpu.dot_dimension_numbers<[1], [0], [0], [1], [0, 0, 1, 1], [], []>} : vector<16x4xbf16>, vector<4x128xbf16>, vector<16x128xf32> -> vector<16x128xf32>
      %c0_15 = arith.constant 0 : index
      %c0_16 = arith.constant 0 : index
      %18 = vector.load %arg5[%c0_15, %c0_16] : memref<16x128xf32, #tpu.memory_space<vmem>>, vector<16x128xf32>
      %19 = arith.addf %17, %18 : vector<16x128xf32>
      %cst_17 = arith.constant 0.000000e+00 : f32
      %20 = vector.broadcast %cst_17 : f32 to vector<16x128xf32>
      %21 = arith.maximumf %19, %20 : vector<16x128xf32>
      %c0_18 = arith.constant 0 : index
      %c0_19 = arith.constant 0 : index
      %c0_20 = arith.constant 0 : index
      %22 = vector.load %arg6[%c0_18, %c0_19, %c0_20] : memref<1x16x128xf32, #tpu.memory_space<vmem>>, vector<1x16x128xf32>
      %23 = vector.shape_cast %22 : vector<1x16x128xf32> to vector<16x128xf32>
      %24 = vector.shape_cast %21 : vector<16x128xf32> to vector<1x16x128xf32>
      tpu.vector_store %arg6[%c0_18, %c0_19, %c0_20], %24 {strides = array<i32>} : memref<1x16x128xf32, #tpu.memory_space<vmem>>, vector<1x16x128xf32>,
    } else {
    }
    return
  }
  func.func @transform_0(%arg0: i32, %arg1: i32) -> (i32, i32, i32) {
    %c0_i32 = arith.constant 0 : i32
    %c0_i32_0 = arith.constant 0 : i32
    return %arg0, %c0_i32, %arg1 : i32, i32, i32
  }
  func.func @transform_1(%arg0: i32, %arg1: i32) -> (i32, i32) {
    %c0_i32 = arith.constant 0 : i32
    %c0_i32_0 = arith.constant 0 : i32
    return %arg1, %c0_i32 : i32, i32
  }
  func.func @transform_2(%arg0: i32, %arg1: i32) -> (i32, i32) {
    %c0_i32 = arith.constant 0 : i32
    %c0_i32_0 = arith.constant 0 : i32
    %c0_i32_1 = arith.constant 0 : i32
    return %c0_i32, %c0_i32_0 : i32, i32
  }
  func.func @transform_3(%arg0: i32, %arg1: i32) -> (i32, i32) {
    %c0_i32 = arith.constant 0 : i32
    %c0_i32_0 = arith.constant 0 : i32
    %c0_i32_1 = arith.constant 0 : i32
    return %c0_i32, %c0_i32_0 : i32, i32
  }
  func.func @transform_4(%arg0: i32, %arg1: i32) -> (i32, i32, i32) {
    %c0_i32 = arith.constant 0 : i32
    %c0_i32_0 = arith.constant 0 : i32
    %c0_i32_1 = arith.constant 0 : i32
    return %arg0, %c0_i32, %c0_i32_0 : i32, i32, i32
  }
}

</mosaic_0001>

<llo_original>
// kernel: tpu_custom_call.1
$region0: #{tpu_custom_call.1}
  #allocation0 [shape = 'u32[]', space=smem, size = 0x4, offset = 0x4, fixed_abs, tag = 'smem constant byte address 0x4 - core index']
  #allocation1 [shape = 'u32[144,128]{1,0:T(1,128)}', space=vmem, size = 0x12000, scoped, tag = 'internal scratch']
  #allocation2 [shape = 'f32[4,128]{1,0:T(4,128)}', space=vmem, size = 0x800, scoped, tag = 'scratch operand']
  %s0 = inlined_call_operand.hbm [shape: f32[2,4,256], index: 0, kind: input, shape index: {}]
  %s1 = inlined_call_operand.hbm [shape: bf16[256,128], index: 1, kind: input, shape index: {}]
  %s2 = inlined_call_operand.vmem [shape: bf16[16,4], index: 2, kind: input, shape index: {}]
  %s3 = inlined_call_operand.hbm [shape: f32[16,128], index: 3, kind: input, shape index: {}]
  %s4 = inlined_call_operand.hbm [shape: f32[2,16,128], index: 4, kind: output, shape index: {}]
  %s5 = sld [smem:[#allocation0]]
  $region69: #{tpu_custom_call.1} parent=0
    _
  %s7 = ssub.s32 1, %s5
  %s8 = scalar_select 0, %s7, %s5
  $region1: #{tpu_custom_call.1} parent=0
    #allocation3 [shape = 'u8[4096]{0}', space=vmem, size = 0x1000, scoped, tag = 'input window, operand 0']
    #allocation4 [shape = 's32[2]{0}', space=sflag, size = 0x8, scoped, tag = 'scoped memory for tpu_custom_call.1']
    #allocation5 [shape = 's32[2]{0}', space=sflag, size = 0x8, scoped, tag = 'scoped memory for tpu_custom_call.1']
    #allocation6 [shape = 'u8[65536]{0}', space=vmem, size = 0x10000, scoped, tag = 'input window, operand 1']
    #allocation7 [shape = 's32[2]{0}', space=sflag, size = 0x8, scoped, tag = 'scoped memory for tpu_custom_call.1']
    #allocation8 [shape = 'u8[8192]{0}', space=vmem, size = 0x2000, scoped, tag = 'input window, operand 3, single buffered']
    #allocation9 [shape = 'u8[16384]{0}', space=vmem, size = 0x4000, scoped, tag = 'output window, operand 0']
    %9 = vsyncpa [#allocation4], 0
    %s10 = scalar_lea.sflag [#allocation4], 1
    %11 = vsyncpa %s10, 0
    %12 = vsyncpa [#allocation7], 0
    %s13 = scalar_lea.sflag [#allocation7], 1
    %14 = vsyncpa %s13, 0
    %15 = vsyncpa [#allocation5], 0
    %s16 = scalar_lea.sflag [#allocation5], 1
    %17 = vsyncpa %s16, 0
    loop: start=0, step=1, limit=6
    $region2: #{tpu_custom_call.1} parent=1 // loop_pre_header
      _
    $region3: #{tpu_custom_call.1} parent=1 // loop_header
      %s19 = sphi 0, %s23
      %p20 = scmp.ge.s32.totalorder %s19, 6
      %s26 = sphi 0, %s38
      %s27 = sphi 0, %s34
      %s28 = sphi 0, %s26
      %s29 = sphi 0, %s27
      %s30 = sphi 0, %s28
      %s31 = sphi 0, %s29
      %s43 = sphi 0, %s45
      %s46 = sphi 0, %s43
      %s47 = sphi 0, %s46
      %s63 = sphi 0, %s47
      %s69 = sphi 0, %s71
      %s72 = sphi 0, %s69
      %s73 = sphi 0, %s72
      %s89 = sphi 0, %s73
      %s93 = sphi 0, %s93
      %s95 = sphi 0, %s93
      %s96 = sphi 0, %s95
      %s110 = sphi 0, %s96
      %s114 = sphi 0, %s114
      %s116 = sphi 0, %s114
      %s117 = sphi 0, %s116
      %s131 = sphi 0, %s117
      %s137 = sphi 0, %s139
      %s140 = sphi 0, %s137
      %s141 = sphi 0, %s140
      %s157 = sphi 0, %s141
    $region4: #{tpu_custom_call.1} parent=1 // loop_header_branch
      %22 = sbr.rel (%p20) target = $region8
    $region5: #{tpu_custom_call.1} parent=1 // loop_body
      %s24 = ssub.s32 %s19, 1
      %s25 = ssub.s32 %s19, 2
      %s32 = sadd.s32 1, %s27
      %p33 = scmp.ge.s32.totalorder %s32, 2
      %s34 = scalar_select %p33, 0, %s32
      %s35 = sadd.s32 1, %s26
      %s36 = scalar_select %p33, %s35, %s26
      %p37 = scmp.ge.s32.totalorder %s36, 2
      %s38 = scalar_select %p37, 0, %s36
      %s39 = ssub.s32 %s26, %s38
      %s40 = ssub.s32 %s27, %s34
      %s41 = sor.u32 %s39, %s40
      %p42 = scmp.eq.s32.totalorder %s41, 0
      %s44 = sadd.s32 %s43, 1
      %s45 = scalar_select %p42, %s43, %s44
      %p48 = pneg %p42
      %p49 = scmp.eq.s32.totalorder %s19, 3
      %p50 = por %p48, %p49
      %p51 = scmp.ne.s32.totalorder %s43, %s46
      %p52 = scmp.eq.s32.totalorder %s19, 0
      %p53 = por %p51, %p52
      %p54 = scmp.ne.s32.totalorder %s43, %s46
      %p55 = scmp.eq.s32.totalorder %s24, 3
      %p56 = por %p54, %p55
      %p57 = scmp.ne.s32.totalorder %s46, %s47
      %p58 = scmp.eq.s32.totalorder %s24, 0
      %p59 = por %p57, %p58
      %p60 = scmp.ne.s32.totalorder %s46, %s47
      %p61 = scmp.eq.s32.totalorder %s25, 3
      %p62 = por %p60, %p61
      %p64 = scmp.ne.s32.totalorder %s47, %s63
      %p65 = scmp.eq.s32.totalorder %s25, 0
      %p66 = por %p64, %p65
      %s67 = ssub.s32 %s27, %s34
      %p68 = scmp.eq.s32.totalorder %s67, 0
      %s70 = sadd.s32 %s69, 1
      %s71 = scalar_select %p68, %s69, %s70
      %p74 = pneg %p68
      %p75 = scmp.eq.s32.totalorder %s19, 3
      %p76 = por %p74, %p75
      %p77 = scmp.ne.s32.totalorder %s69, %s72
      %p78 = scmp.eq.s32.totalorder %s19, 0
      %p79 = por %p77, %p78
      %p80 = scmp.ne.s32.totalorder %s69, %s72
      %p81 = scmp.eq.s32.totalorder %s24, 3
      %p82 = por %p80, %p81
      %p83 = scmp.ne.s32.totalorder %s72, %s73
      %p84 = scmp.eq.s32.totalorder %s24, 0
      %p85 = por %p83, %p84
      %p86 = scmp.ne.s32.totalorder %s72, %s73
      %p87 = scmp.eq.s32.totalorder %s25, 3
      %p88 = por %p86, %p87
      %p90 = scmp.ne.s32.totalorder %s73, %s89
      %p91 = scmp.eq.s32.totalorder %s25, 0
      %p92 = por %p90, %p91
      %s94 = sadd.s32 %s93, 1
      %p97 = scmp.eq.s32.totalorder %s19, 3
      %p98 = scmp.ne.s32.totalorder %s93, %s95
      %p99 = scmp.eq.s32.totalorder %s19, 0
      %p100 = por %p98, %p99
      %p101 = scmp.ne.s32.totalorder %s93, %s95
      %p102 = scmp.eq.s32.totalorder %s24, 3
      %p103 = por %p101, %p102
      %p104 = scmp.ne.s32.totalorder %s95, %s96
      %p105 = scmp.eq.s32.totalorder %s24, 0
      %p106 = por %p104, %p105
      %p107 = scmp.ne.s32.totalorder %s95, %s96
      %p108 = scmp.eq.s32.totalorder %s25, 3
      %p109 = por %p107, %p108
      %p111 = scmp.ne.s32.totalorder %s96, %s110
      %p112 = scmp.eq.s32.totalorder %s25, 0
      %p113 = por %p111, %p112
      %s115 = sadd.s32 %s114, 1
      %p118 = scmp.eq.s32.totalorder %s19, 3
      %p119 = scmp.ne.s32.totalorder %s114, %s116
      %p120 = scmp.eq.s32.totalorder %s19, 0
      %p121 = por %p119, %p120
      %p122 = scmp.ne.s32.totalorder %s114, %s116
      %p123 = scmp.eq.s32.totalorder %s24, 3
      %p124 = por %p122, %p123
      %p125 = scmp.ne.s32.totalorder %s116, %s117
      %p126 = scmp.eq.s32.totalorder %s24, 0
      %p127 = por %p125, %p126
      %p128 = scmp.ne.s32.totalorder %s116, %s117
      %p129 = scmp.eq.s32.totalorder %s25, 3
      %p130 = por %p128, %p129
      %p132 = scmp.ne.s32.totalorder %s117, %s131
      %p133 = scmp.eq.s32.totalorder %s25, 0
      %p134 = por %p132, %p133
      %s135 = ssub.s32 %s26, %s38
      %p136 = scmp.eq.s32.totalorder %s135, 0
      %s138 = sadd.s32 %s137, 1
      %s139 = scalar_select %p136, %s137, %s138
      %p142 = pneg %p136
      %p143 = scmp.eq.s32.totalorder %s19, 3
      %p144 = por %p142, %p143
      %p145 = scmp.ne.s32.totalorder %s137, %s140
      %p146 = scmp.eq.s32.totalorder %s19, 0
      %p147 = por %p145, %p146
      %p148 = scmp.ne.s32.totalorder %s137, %s140
      %p149 = scmp.eq.s32.totalorder %s24, 3
      %p150 = por %p148, %p149
      %p151 = scmp.ne.s32.totalorder %s140, %s141
      %p152 = scmp.eq.s32.totalorder %s24, 0
      %p153 = por %p151, %p152
      %p154 = scmp.ne.s32.totalorder %s140, %s141
      %p155 = scmp.eq.s32.totalorder %s25, 3
      %p156 = por %p154, %p155
      %p158 = scmp.ne.s32.totalorder %s141, %s157
      %p159 = scmp.eq.s32.totalorder %s25, 0
      %p160 = por %p158, %p159
      %p161 = scmp.le.s32.totalorder 1, %s19
      %p162 = scmp.lt.s32.totalorder %s19, 5
      %p163 = pnand %p161, %p162
      %p164 = pneg %p163
      // Predicated region
      $region9: #{tpu_custom_call.1} parent=5 // pred_check
        _
      $region10: #{tpu_custom_call.1} parent=5 // pred_check_branch
        %166 = sbr.rel (%p163) target = $region12
      $region11: #{tpu_custom_call.1} parent=5 // pred_region
        %s167 = ssub.s32 %s19, 1
        // Predicated region
        $region13: #{tpu_custom_call.1} parent=11 // pred_check
          %p168 = pneg %p106
        $region14: #{tpu_custom_call.1} parent=11 // pred_check_branch
          %170 = sbr.rel (%p168) target = $region16
        $region15: #{tpu_custom_call.1} parent=11 // pred_region
          _
        $region16: #{tpu_custom_call.1} parent=11 // pred_fallthru
          _
        // Predicated region
        $region17: #{tpu_custom_call.1} parent=11 // pred_check
          %p171 = pneg %p127
        $region18: #{tpu_custom_call.1} parent=11 // pred_check_branch
          %173 = sbr.rel (%p171) target = $region20
        $region19: #{tpu_custom_call.1} parent=11 // pred_region
          %s175 = ssub.s32 256, 256
          %176 = vsyncadd [#allocation7], %s175
          %s177 = sshll.u32 [#allocation8], 4
          %s178 = int_to_ptr.vmem [resolvable:$true] %s177
          %183 = dma.hbm_to_vmem [thread:$0]  %s3, 256, %s178, [#allocation7], 128, 128, 8
        $region20: #{tpu_custom_call.1} parent=11 // pred_fallthru
          _
      $region12: #{tpu_custom_call.1} parent=5 // pred_fallthru
        _
      %p184 = scmp.lt.s32.totalorder %s19, 4
      // Predicated region
      $region21: #{tpu_custom_call.1} parent=5 // pred_check
        %p185 = pneg %p184
      $region22: #{tpu_custom_call.1} parent=5 // pred_check_branch
        %187 = sbr.rel (%p185) target = $region24
      $region23: #{tpu_custom_call.1} parent=5 // pred_region
        // Predicated region
        $region25: #{tpu_custom_call.1} parent=23 // pred_check
          %p188 = pneg %p53
        $region26: #{tpu_custom_call.1} parent=23 // pred_check_branch
          %190 = sbr.rel (%p188) target = $region28
        $region27: #{tpu_custom_call.1} parent=23 // pred_region
          %s191 = sand.u32 %s43, 1
          %s192 = scalar_lea.sflag [#allocation4], %s191
          %s193 = sand.u32 %s43, 1
          %s194 = smul.addr %s193, 4
          %s195 = scalar_lea.vmem [#allocation3], %s194
          %s197 = ssub.s32 64, 64
          %198 = vsyncadd %s192, %s197
          %s199 = smul.addr %s26, 2
          %s200 = sadd.s32 %s27, %s199
          %s201 = smul.addr %s200, 64
          %s202 = scalar_lea.hbm %s0, %s201
          %s204 = sshll.u32 %s195, 4
          %s205 = int_to_ptr.vmem [resolvable:$true] %s204
          %207 = dma.hbm_to_vmem [thread:$0]  %s202, 64, %s205, %s192
        $region28: #{tpu_custom_call.1} parent=23 // pred_fallthru
          _
        // Predicated region
        $region29: #{tpu_custom_call.1} parent=23 // pred_check
          %p208 = pneg %p79
        $region30: #{tpu_custom_call.1} parent=23 // pred_check_branch
          %210 = sbr.rel (%p208) target = $region32
        $region31: #{tpu_custom_call.1} parent=23 // pred_region
          %s211 = sand.u32 %s19, 1
          %s212 = scalar_lea.sflag [#allocation7], %s211
          %s213 = sand.u32 %s69, 1
          %s214 = smul.addr %s213, 64
          %s215 = scalar_lea.vmem [#allocation6], %s214
          %s216 = smul.u32 16, %s27
          %s218 = ssub.s32 1024, 1024
          %219 = vsyncadd %s212, %s218
          %s220 = smul.addr %s216, 64
          %s221 = scalar_lea.hbm %s1, %s220
          %s222 = sshll.u32 %s215, 4
          %s223 = int_to_ptr.vmem [resolvable:$true] %s222
          %228 = dma.hbm_to_vmem [thread:$0]  %s221, 1024, %s223, %s212, 64, 64, 4
        $region32: #{tpu_custom_call.1} parent=23 // pred_fallthru
          _
      $region24: #{tpu_custom_call.1} parent=5 // pred_fallthru
        _
      %p229 = scmp.le.s32.totalorder 1, %s19
      %p230 = scmp.lt.s32.totalorder %s19, 5
      %p231 = pnand %p229, %p230
      %p232 = pneg %p231
      // Predicated region
      $region33: #{tpu_custom_call.1} parent=5 // pred_check
        _
      $region34: #{tpu_custom_call.1} parent=5 // pred_check_branch
        %234 = sbr.rel (%p231) target = $region36
      $region35: #{tpu_custom_call.1} parent=5 // pred_region
        %s235 = ssub.s32 %s19, 1
        %s236 = sand.u32 %s46, 1
        %s237 = scalar_lea.sflag [#allocation4], %s236
        %s238 = sand.u32 %s46, 1
        %s239 = smul.addr %s238, 4
        %s240 = scalar_lea.vmem [#allocation3], %s239
        // Predicated region
        $region37: #{tpu_custom_call.1} parent=35 // pred_check
          %p241 = pneg %p59
        $region38: #{tpu_custom_call.1} parent=35 // pred_check_branch
          %243 = sbr.rel (%p241) target = $region40
        $region39: #{tpu_custom_call.1} parent=35 // pred_region
          %244 = dma.done %s237, 64
        $region40: #{tpu_custom_call.1} parent=35 // pred_fallthru
          _
        %s245 = sand.u32 %s24, 1
        %s246 = scalar_lea.sflag [#allocation7], %s245
        %s247 = sand.u32 %s72, 1
        %s248 = smul.addr %s247, 64
        %s249 = scalar_lea.vmem [#allocation6], %s248
        // Predicated region
        $region41: #{tpu_custom_call.1} parent=35 // pred_check
          %p250 = pneg %p85
        $region42: #{tpu_custom_call.1} parent=35 // pred_check_branch
          %252 = sbr.rel (%p250) target = $region44
        $region43: #{tpu_custom_call.1} parent=35 // pred_region
          %253 = dma.done %s246, 1024
        $region44: #{tpu_custom_call.1} parent=35 // pred_fallthru
          _
        // Predicated region
        $region45: #{tpu_custom_call.1} parent=35 // pred_check
          %p254 = pneg %p127
        $region46: #{tpu_custom_call.1} parent=35 // pred_check_branch
          %256 = sbr.rel (%p254) target = $region48
        $region47: #{tpu_custom_call.1} parent=35 // pred_region
          %257 = dma.done [#allocation7], 256
        $region48: #{tpu_custom_call.1} parent=35 // pred_fallthru
          _
        %s258 = sand.u32 %s46, 1
        %s259 = scalar_lea.sflag [#allocation4], %s258
        %s260 = sand.u32 %s46, 1
        %s261 = smul.addr %s260, 4
        %s262 = scalar_lea.vmem [#allocation3], %s261
        %p263 = pneg %p59
        %p264 = pneg %p56
        %s265 = sand.u32 %s24, 1
        %s266 = scalar_lea.sflag [#allocation7], %s265
        %s267 = sand.u32 %s72, 1
        %s268 = smul.addr %s267, 64
        %s269 = scalar_lea.vmem [#allocation6], %s268
        %p270 = pneg %p85
        %p271 = pneg %p82
        %p272 = pneg %p106
        %p273 = pneg %p103
        %p274 = pneg %p127
        %p275 = pneg %p124
        %p276 = pneg %p153
        %p277 = pneg %p150
        %s278 = sand.u32 %s140, 1
        %s279 = scalar_lea.sflag [#allocation5], %s278
        %s280 = sand.u32 %s140, 1
        %s281 = smul.addr %s280, 16
        %s282 = scalar_lea.vmem [#allocation9], %s281
        %s283 = smul.u32 16, %s29
        %p285 = scmp.eq.s32.totalorder %s29, 0
        // Predicated region
        $region49: #{tpu_custom_call.1} parent=35 // pred_check
          %p286 = pneg %p285
        $region50: #{tpu_custom_call.1} parent=35 // pred_check_branch
          %288 = sbr.rel (%p286) target = $region52
        $region51: #{tpu_custom_call.1} parent=35 // pred_region
          %289 = vst [vmem:[#allocation2] sm:$0xf] 0.0
        $region52: #{tpu_custom_call.1} parent=35 // pred_fallthru
          _
        %v290 = vld [vmem:[#allocation2] sm:$0xf]
        %v291 = vld [vmem:[%s240] sm:$0xf]
        %v292 = vpack.c.bf16 %v291, %v291
        %v293 = vld [vmem:[%s249] sm:$0xf]
        %v294 = vld [vmem:[%s249 + $0x4] sm:$0xf]
        %v295 = vld [vmem:[%s249 + $0x8] sm:$0xf]
        %v296 = vld [vmem:[%s249 + $0xc] sm:$0xf]
        %v297 = vld [vmem:[%s249 + $0x10] sm:$0xf]
        %v298 = vld [vmem:[%s249 + $0x14] sm:$0xf]
        %v299 = vld [vmem:[%s249 + $0x18] sm:$0xf]
        %v300 = vld [vmem:[%s249 + $0x1c] sm:$0xf]
        %v301 = vld [vmem:[%s249 + $0x20] sm:$0xf]
        %v302 = vld [vmem:[%s249 + $0x24] sm:$0xf]
        %v303 = vld [vmem:[%s249 + $0x28] sm:$0xf]
        %v304 = vld [vmem:[%s249 + $0x2c] sm:$0xf]
        %v305 = vld [vmem:[%s249 + $0x30] sm:$0xf]
        %v306 = vld [vmem:[%s249 + $0x34] sm:$0xf]
        %v307 = vld [vmem:[%s249 + $0x38] sm:$0xf]
        %v308 = vld [vmem:[%s249 + $0x3c] sm:$0xf]
        %v325 = vunpack.c.l.b16 %v293
        %v326 = vunpack.c.l.b16 %v294
        %v327 = vunpack.c.l.b16 %v295
        %v328 = vunpack.c.l.b16 %v296
        %v329 = vunpack.c.l.b16 %v297
        %v330 = vunpack.c.l.b16 %v298
        %v331 = vunpack.c.l.b16 %v299
        %v332 = vunpack.c.l.b16 %v300
        %v333 = vunpack.c.l.b16 %v301
        %v334 = vunpack.c.l.b16 %v302
        %v335 = vunpack.c.l.b16 %v303
        %v336 = vunpack.c.l.b16 %v304
        %v337 = vunpack.c.l.b16 %v305
        %v338 = vunpack.c.l.b16 %v306
        %v339 = vunpack.c.l.b16 %v307
        %v340 = vunpack.c.l.b16 %v308
        %v341 = vpack.c.b16 %v326, %v325
        %v342 = vpack.c.b16 %v328, %v327
        %v343 = vpack.c.b16 %v330, %v329
        %v344 = vpack.c.b16 %v332, %v331
        %v345 = vpack.c.b16 %v334, %v333
        %v346 = vpack.c.b16 %v336, %v335
        %v347 = vpack.c.b16 %v338, %v337
        %v348 = vpack.c.b16 %v340, %v339
        %357 = vmatprep.subr.bf16.mxu0 0
        %358 = vmatpush1.bf16.msra.mxu0 %v348
        %359 = vmatprep.subr.bf16.mxu0 0
        %360 = vmatpush1.bf16.msra.mxu0 %v347
        %361 = vmatprep.subr.bf16.mxu0 0
        %362 = vmatpush1.bf16.msra.mxu0 %v346
        %363 = vmatprep.subr.bf16.mxu0 0
        %364 = vmatpush1.bf16.msra.mxu0 %v345
        %365 = vmatprep.subr.bf16.mxu0 0
        %366 = vmatpush1.bf16.msra.mxu0 %v344
        %367 = vmatprep.subr.bf16.mxu0 0
        %368 = vmatpush1.bf16.msra.mxu0 %v343
        %369 = vmatprep.subr.bf16.mxu0 0
        %370 = vmatpush1.bf16.msra.mxu0 %v342
        %371 = vmatprep.subr.bf16.mxu0 0
        %372 = vmatpush1.bf16.msra.mxu0 %v341
        %373 = vmatprep.subr.bf16.mxu0 0
        %374 = vmatpush2.bf16.msra.mxu0 0
        %375 = vmatprep.subr.bf16.mxu0 0
        %376 = vmatpush2.bf16.msra.mxu0 0
        %377 = vmatprep.subr.bf16.mxu0 0
        %378 = vmatpush2.bf16.msra.mxu0 0
        %379 = vmatprep.subr.bf16.mxu0 0
        %380 = vmatpush2.bf16.msra.mxu0 0
        %381 = vmatprep.subr.bf16.mxu0 0
        %382 = vmatpush2.bf16.msra.mxu0 0
        %383 = vmatprep.subr.bf16.mxu0 0
        %384 = vmatpush2.bf16.msra.mxu0 0
        %385 = vmatprep.subr.bf16.mxu0 0
        %386 = vmatpush2.bf16.msra.mxu0 0
        %387 = vmatprep.subr.bf16.mxu0 0
        %388 = vmatpush2.bf16.msra.mxu0 0
        %389 = vmatprep.mubr.bf16.mxu0 0
        %390 = vmatmul.mubr.bf16.gmra.mxu0 %v292
        %v391 = vpop.f32.mrf.mxu0
        %v392 = vadd.f32 0.0, %v391
        %v393 = vpop.f32.mrf.mxu0
        %v394 = vpop.f32.mrf.mxu0
        %v395 = vpop.f32.mrf.mxu0
        %396 = vdwg.mxu0
        %v397 = vadd.f32 %v290, %v392
        %398 = vst [vmem:[#allocation2] sm:$0xf] %v397
        %p399 = scmp.eq.s32.totalorder %s29, 1
        // Predicated region
        $region53: #{tpu_custom_call.1} parent=35 // pred_check
          %p400 = pneg %p399
        $region54: #{tpu_custom_call.1} parent=35 // pred_check_branch
          %402 = sbr.rel (%p400) target = $region56
        $region55: #{tpu_custom_call.1} parent=35 // pred_region
          %v403 = vld [vmem:[%s2] sm:$0xf]
          %v404 = vld [vmem:[%s2 + $0x4] sm:$0xf]
          %v405 = vld [vmem:[#allocation2] sm:$0xf]
          %v406 = vpack.c.bf16 %v405, %v405
          %v407 = vld [vmem:[#allocation8] sm:$0xff]
          %v408 = vld [vmem:[#allocation8 + $0x8] sm:$0xff]
          %v411 = vunpack.c.l.b16 %v403
          %v412 = vunpack.c.l.b16 %v404
          %v413 = vpack.c.b16 %v412, %v411
          %vm414 = vcmask 31744
          %v416 = vsel %vm414, %v413, 0
          %vm418 = vcmask 1041408
          %v420 = vsel %vm418, %v406, 0
          %422 = vmatprep.subr.bf16.mxu0 0
          %423 = vmatpush1.bf16.msra.mxu0 0
          %424 = vmatprep.subr.bf16.mxu0 0
          %425 = vmatpush1.bf16.msra.mxu0 0
          %426 = vmatprep.subr.bf16.mxu0 0
          %427 = vmatpush1.bf16.msra.mxu0 0
          %428 = vmatprep.subr.bf16.mxu0 0
          %429 = vmatpush1.bf16.msra.mxu0 0
          %430 = vmatprep.subr.bf16.mxu0 0
          %431 = vmatpush1.bf16.msra.mxu0 0
          %432 = vmatprep.subr.bf16.mxu0 0
          %433 = vmatpush1.bf16.msra.mxu0 0
          %434 = vmatprep.subr.bf16.mxu0 0
          %435 = vmatpush1.bf16.msra.mxu0 0
          %436 = vmatprep.subr.bf16.mxu0 0
          %437 = vmatpush1.bf16.msra.mxu0 %v420
          %438 = vmatprep.subr.bf16.mxu0 0
          %439 = vmatpush2.bf16.msra.mxu0 0
          %440 = vmatprep.subr.bf16.mxu0 0
          %441 = vmatpush2.bf16.msra.mxu0 0
          %442 = vmatprep.subr.bf16.mxu0 0
          %443 = vmatpush2.bf16.msra.mxu0 0
          %444 = vmatprep.subr.bf16.mxu0 0
          %445 = vmatpush2.bf16.msra.mxu0 0
          %446 = vmatprep.subr.bf16.mxu0 0
          %447 = vmatpush2.bf16.msra.mxu0 0
          %448 = vmatprep.subr.bf16.mxu0 0
          %449 = vmatpush2.bf16.msra.mxu0 0
          %450 = vmatprep.subr.bf16.mxu0 0
          %451 = vmatpush2.bf16.msra.mxu0 0
          %452 = vmatprep.subr.bf16.mxu0 0
          %453 = vmatpush2.bf16.msra.mxu0 0
          %454 = vmatprep.mubr.bf16.mxu0 0
          %455 = vmatmul.mubr.bf16.gmra.mxu0 %v416
          %v456 = vpop.f32.mrf.mxu0
          %v457 = vadd.f32 %v407, %v456
          %v458 = vpop.f32.mrf.mxu0
          %v459 = vpop.f32.mrf.mxu0
          %v460 = vadd.f32 %v408, %v459
          %v461 = vpop.f32.mrf.mxu0
          %462 = vdwg.mxu0
          %v463 = vmax.f32 %v457, 0.0
          %v464 = vmax.f32 %v460, 0.0
          %465 = vst [vmem:[%s282] sm:$0xff] %v463
          %466 = vst [vmem:[%s282 + $0x8] sm:$0xff] %v464
        $region56: #{tpu_custom_call.1} parent=35 // pred_fallthru
          _
        %s467 = sand.u32 %s140, 1
        %s468 = scalar_lea.sflag [#allocation5], %s467
        %s469 = sand.u32 %s140, 1
        %s470 = smul.addr %s469, 16
        %s471 = scalar_lea.vmem [#allocation9], %s470
        // Predicated region
        $region57: #{tpu_custom_call.1} parent=35 // pred_check
          %p472 = pneg %p150
        $region58: #{tpu_custom_call.1} parent=35 // pred_check_branch
          %474 = sbr.rel (%p472) target = $region60
        $region59: #{tpu_custom_call.1} parent=35 // pred_region
          %s476 = ssub.s32 256, 256
          %477 = vsyncadd %s468, %s476
          %s478 = smul.addr %s28, 2
          %s479 = smul.addr %s478, 128
          %s480 = scalar_lea.hbm %s4, %s479
          %s481 = sshll.u32 %s471, 4
          %s482 = int_to_ptr.vmem [resolvable:$true] %s481
          %487 = dma.vmem_to_hbm [thread:$0]  %s482, 256, %s480, %s468, 128, 128, 8
        $region60: #{tpu_custom_call.1} parent=35 // pred_fallthru
          _
      $region36: #{tpu_custom_call.1} parent=5 // pred_fallthru
        _
      %p488 = scmp.le.s32.totalorder 2, %s19
      // Predicated region
      $region61: #{tpu_custom_call.1} parent=5 // pred_check
        %p489 = pneg %p488
      $region62: #{tpu_custom_call.1} parent=5 // pred_check_branch
        %491 = sbr.rel (%p489) target = $region64
      $region63: #{tpu_custom_call.1} parent=5 // pred_region
        %s492 = ssub.s32 %s19, 2
        // Predicated region
        $region65: #{tpu_custom_call.1} parent=63 // pred_check
          %p493 = pneg %p156
        $region66: #{tpu_custom_call.1} parent=63 // pred_check_branch
          %495 = sbr.rel (%p493) target = $region68
        $region67: #{tpu_custom_call.1} parent=63 // pred_region
          %s496 = sand.u32 %s141, 1
          %s497 = scalar_lea.sflag [#allocation5], %s496
          %s498 = sand.u32 %s141, 1
          %s499 = smul.addr %s498, 16
          %s500 = scalar_lea.vmem [#allocation9], %s499
          %501 = dma.done %s497, 256
        $region68: #{tpu_custom_call.1} parent=63 // pred_fallthru
          _
      $region64: #{tpu_custom_call.1} parent=5 // pred_fallthru
        _
    $region6: #{tpu_custom_call.1} parent=1 // loop_footer
      %s23 = sadd.s32 1, %s19
    $region7: #{tpu_custom_call.1} parent=1 // loop_footer_branch
      %18 = sbr.rel target = $region3
    $region8: #{tpu_custom_call.1} parent=1 // loop_exit
      _
    %502 = vsyncpa [#allocation4], 1
    %s503 = scalar_lea.sflag [#allocation4], 1
    %504 = vsyncpa %s503, 1
    %505 = vsyncpa [#allocation7], 1
    %s506 = scalar_lea.sflag [#allocation7], 1
    %507 = vsyncpa %s506, 1
    %508 = vsyncpa [#allocation5], 1
    %s509 = scalar_lea.sflag [#allocation5], 1
    %510 = vsyncpa %s509, 1

</llo_original>
